<compile_context>
chip_gen: v6e
topology: v6e:2x2x1
jax: 0.10.0
libtpu: 0.0.40
codegen_flags: <defaults>
</compile_context>

<pallas_src>
import functools

import jax
import jax.numpy as jnp
from jax.experimental import pallas as pl
from jax.experimental.pallas import tpu as pltpu

_LANE = 128
_SUBLANE = 8
_MAX_TK = 8192           # depth kept whole per block up to this many columns
_X_TILE_BYTES = 4 << 20  # per-buffer x-tile byte target (mem-bound sweet spot)


def _round_up(n: int, m: int) -> int:
    return ((n + m - 1) // m) * m


def _depth_tiling(d: int):
    """Returns (TK, D_pad): depth block size and padded depth extent."""
    if d <= _MAX_TK:
        return d, d
    return _MAX_TK, _round_up(d, _MAX_TK)


def _ordinal_fc_kernel(x_ref, w_ref, b_ref, o_ref, acc_ref):
    # x_ref: (TB, TK)  w_ref: (TK, Kp)  b_ref: (1, Kp)
    # o_ref: (TB, K)   acc_ref: (TB, Kp) f32 scratch
    k = pl.program_id(1)

    @pl.when(k == 0)
    def _():
        acc_ref[...] = jnp.zeros_like(acc_ref)

    acc_ref[...] += jnp.dot(x_ref[...], w_ref[...],
                            preferred_element_type=jnp.float32)

    @pl.when(k == pl.num_programs(1) - 1)
    def _():
        z = acc_ref[...] + b_ref[...].astype(jnp.float32)
        # Sigmoid epilogue runs on the EUP -> effectively free in this
        # DMA-bound kernel.  Store only the K real heads: the small masked
        # store is negligible next to the Kp/K (e.g. 32x) HBM writes it saves.
        y = jax.nn.sigmoid(z)
        o_ref[...] = y[:, : o_ref.shape[1]].astype(o_ref.dtype)


def prepare_params(weight, bias):
    """One-time parameter prep (outside the per-call path): transpose W to
    (D_pad, Kp), zero-padding heads to a full 128-lane vreg and the depth dim
    to the reduction-block multiple (only relevant for huge D)."""
    K, D = weight.shape
    Kp = _round_up(max(K, _LANE), _LANE)
    _, D_pad = _depth_tiling(D)
    w_t = jnp.zeros((D_pad, Kp), weight.dtype).at[:D, :K].set(weight.T)
    b_p = jnp.zeros((1, Kp), jnp.float32).at[0, :K].set(bias.astype(jnp.float32))
    return w_t, b_p


@functools.partial(jax.jit, static_argnames=("num_heads",))
def ordinal_fully_connected(x, w_t, b_p, *, num_heads: int):
    """x: (B, D); w_t/b_p from prepare_params.
    Returns sigmoid(x @ W^T + b) with shape (B, num_heads)."""
    B, D = x.shape
    K = num_heads
    Kp = w_t.shape[1]
    TK, D_pad = _depth_tiling(D)
    if w_t.shape[0] != D_pad:
        raise ValueError("w_t was not produced by prepare_params for this D")
    nk = D_pad // TK

    if D_pad != D:
        # Rare huge-D (> _MAX_TK) path only: pad depth so reduction blocks
        # tile exactly (garbage columns must not enter the running sum).
        # TODO(synk): replace with a masked ragged depth block to drop this pass.
        x = jnp.pad(x, ((0, 0), (0, D_pad - D)))

    # Batch tile: byte-budgeted (VMEM stores the last dim padded to 128 lanes)
    # and capped so the batch grid has >= 2 steps when possible, letting the
    # "parallel" axis feed both v7x TensorCores.
    itemsize = x.dtype.itemsize
    lane_tk = _round_up(TK, _LANE)
    bytes_per_row = lane_tk * itemsize
    tb_budget = max(_SUBLANE, (_X_TILE_BYTES // bytes_per_row) // _SUBLANE * _SUBLANE)
    tb_split = _round_up(pl.cdiv(B, 2), _SUBLANE) if B > _SUBLANE else _SUBLANE
    TB = max(_SUBLANE, min(tb_budget, tb_split, _round_up(B, _SUBLANE)))
    nb = pl.cdiv(B, TB)

    # VMEM budget from the real (tiling-padded) in-VMEM footprints, counting
    # the default double-buffering of every pipelined operand.
    # TODO(synk): pipeline_mode=pl.Buffered(1) on w_t/b_p when nk == 1 would
    # drop the second weight buffer (extra headroom on v7x's 64 MiB VMEM).
    x_tile = TB * lane_tk * itemsize
    w_tile = _round_up(TK, _SUBLANE) * Kp * w_t.dtype.itemsize
    o_tile = TB * _round_up(K, _LANE) * itemsize
    b_tile = _SUBLANE * Kp * 4
    acc_bytes = TB * Kp * 4
    vmem_needed = 2 * (x_tile + w_tile + o_tile + b_tile) + acc_bytes
    vmem_limit = int(min(max(vmem_needed + (4 << 20), 16 << 20), 64 << 20))

    # TODO(synk): if numerics tolerate it, stream x / w_t as bf16 (f32
    # accumulation already in place) to halve the dominant HBM read traffic.
    out = pl.pallas_call(
        _ordinal_fc_kernel,
        out_shape=jax.ShapeDtypeStruct((B, K), x.dtype),
        grid=(nb, nk),
        in_specs=[
            pl.BlockSpec((TB, TK), lambda i, k: (i, k)),   # stream x tiles
            pl.BlockSpec((TK, Kp), lambda i, k: (k, 0)),   # weight (resident when nk==1)
            pl.BlockSpec((1, Kp), lambda i, k: (0, 0)),    # bias resident
        ],
        out_specs=pl.BlockSpec((TB, K), lambda i, k: (i, 0)),  # native-width output
        scratch_shapes=[pltpu.VMEM((TB, Kp), jnp.float32)],    # f32 accumulator
        compiler_params=pltpu.CompilerParams(
            dimension_semantics=("parallel", "arbitrary"),
            vmem_limit_bytes=vmem_limit,
        ),
    )(x, w_t, b_p)
    return out


def init_params(key, input_size, num_classes, dtype=jnp.float32):
    """Deterministic init matching nn.Linear's uniform(-1/sqrt(D), 1/sqrt(D))."""
    K = num_classes - 1
    kw, kb = jax.random.split(key)
    bound = 1.0 / jnp.sqrt(jnp.asarray(input_size, dtype))
    weight = jax.random.uniform(kw, (K, input_size), dtype, -bound, bound)
    bias = jax.random.uniform(kb, (K,), dtype, -bound, bound)
    return weight, bias


if __name__ == "__main__":
    key = jax.random.PRNGKey(0)
    k_x, k_p, k_x2, k_p2 = jax.random.split(key, 4)

    # Case 1: shapes implied by the module (batch=2, input_size=32, 5 classes).
    batch, input_size, num_classes = 2, 32, 5
    x = jax.random.normal(k_x, (batch, input_size), jnp.float32)
    weight, bias = init_params(k_p, input_size, num_classes)
    w_t, b_p = prepare_params(weight, bias)          # one-time parameter prep
    out = jax.block_until_ready(
        ordinal_fully_connected(x, w_t, b_p, num_heads=num_classes - 1))
    ref = jax.nn.sigmoid(x @ weight.T + bias[None, :])
    assert out.shape == (batch, num_classes - 1)
    assert jnp.allclose(out, ref, atol=1e-5, rtol=1e-5)

    # Case 2: ragged batch (B not a multiple of the batch tile) exercises the
    # partial-last-block path that replaced the wrapper-side padding/slice.
    batch2, input_size2, num_classes2 = 19, 48, 7
    x2 = jax.random.normal(k_x2, (batch2, input_size2), jnp.float32)
    weight2, bias2 = init_params(k_p2, input_size2, num_classes2)
    w_t2, b_p2 = prepare_params(weight2, bias2)
    out2 = jax.block_until_ready(
        ordinal_fully_connected(x2, w_t2, b_p2, num_heads=num_classes2 - 1))
    ref2 = jax.nn.sigmoid(x2 @ weight2.T + bias2[None, :])
    assert out2.shape == (batch2, num_classes2 - 1)
    assert jnp.allclose(out2, ref2, atol=1e-5, rtol=1e-5)

    print("KERNEL_OK")
</pallas_src>

<mosaic_0001>
module attributes {stable_mosaic.version = 11 : i64} {
  func.func @_ordinal_fc_kernel(%arg0: i32, %arg1: i32, %arg2: memref<8x32xf32, #tpu.memory_space<vmem>>, %arg3: memref<32x128xf32, #tpu.memory_space<vmem>>, %arg4: memref<1x128xf32, #tpu.memory_space<vmem>>, %arg5: memref<8x4xf32, #tpu.memory_space<vmem>>, %arg6: memref<8x128xf32, #tpu.memory_space<vmem>>) attributes {dimension_semantics = [#tpu.dimension_semantics<parallel>, #tpu.dimension_semantics<arbitrary>], iteration_bounds = array<i64: 1, 1>, scalar_prefetch = 0 : i64, scratch_operands = 1 : i64, tpu.core_type = #tpu.core_type<tc>, window_params = [{transform_indices = @transform_0, window_bounds = array<i64: 8, 32>}, {transform_indices = @transform_1, window_bounds = array<i64: 32, 128>}, {pipeline_mode = #tpu.pipeline_mode<synchronous>, transform_indices = @transform_2, window_bounds = array<i64: 1, 128>}, {transform_indices = @transform_3, window_bounds = array<i64: 8, 4>}]} {
    %c0_i32 = arith.constant 0 : i32
    %0 = arith.cmpi eq, %arg1, %c0_i32 : i32
    %1 = arith.extui %0 : i1 to i32
    %c0_i32_0 = arith.constant 0 : i32
    %2 = arith.cmpi ne, %1, %c0_i32_0 : i32
    scf.if %2 {
      %cst_10 = arith.constant 0.000000e+00 : f32
      %12 = vector.broadcast %cst_10 : f32 to vector<8x128xf32>
      %c0_11 = arith.constant 0 : index
      %c0_12 = arith.constant 0 : index
      %13 = vector.load %arg6[%c0_11, %c0_12] : memref<8x128xf32, #tpu.memory_space<vmem>>, vector<8x128xf32>
      tpu.vector_store %arg6[%c0_11, %c0_12], %12 {strides = array<i32>} : memref<8x128xf32, #tpu.memory_space<vmem>>, vector<8x128xf32>,
    } else {
    }
    %c0 = arith.constant 0 : index
    %c0_1 = arith.constant 0 : index
    %3 = vector.load %arg6[%c0, %c0_1] : memref<8x128xf32, #tpu.memory_space<vmem>>, vector<8x128xf32>
    %c0_2 = arith.constant 0 : index
    %c0_3 = arith.constant 0 : index
    %4 = vector.load %arg2[%c0_2, %c0_3] : memref<8x32xf32, #tpu.memory_space<vmem>>, vector<8x32xf32>
    %c0_4 = arith.constant 0 : index
    %c0_5 = arith.constant 0 : index
    %5 = vector.load %arg3[%c0_4, %c0_5] : memref<32x128xf32, #tpu.memory_space<vmem>>, vector<32x128xf32>
    %cst = arith.constant dense<0.000000e+00> : vector<8x128xf32>
    %6 = tpu.matmul %4, %5, %cst {dimension_numbers = #tpu.dot_dimension_numbers<[1], [0], [0], [1], [0, 0, 1, 1], [], []>} : vector<8x32xf32>, vector<32x128xf32>, vector<8x128xf32> -> vector<8x128xf32>
    %7 = arith.addf %3, %6 : vector<8x128xf32>
    %c0_6 = arith.constant 0 : index
    %c0_7 = arith.constant 0 : index
    %8 = vector.load %arg6[%c0_6, %c0_7] : memref<8x128xf32, #tpu.memory_space<vmem>>, vector<8x128xf32>
    tpu.vector_store %arg6[%c0_6, %c0_7], %7 {strides = array<i32>} : memref<8x128xf32, #tpu.memory_space<vmem>>, vector<8x128xf32>,
    %c0_i32_8 = arith.constant 0 : i32
    %9 = arith.cmpi eq, %arg1, %c0_i32_8 : i32
    %10 = arith.extui %9 : i1 to i32
    %c0_i32_9 = arith.constant 0 : i32
    %11 = arith.cmpi ne, %10, %c0_i32_9 : i32
    scf.if %11 {
      %c0_10 = arith.constant 0 : index
      %c0_11 = arith.constant 0 : index
      %12 = vector.load %arg6[%c0_10, %c0_11] : memref<8x128xf32, #tpu.memory_space<vmem>>, vector<8x128xf32>
      %c0_12 = arith.constant 0 : index
      %c0_13 = arith.constant 0 : index
      %13 = vector.load %arg4[%c0_12, %c0_13] : memref<1x128xf32, #tpu.memory_space<vmem>>, vector<1x128xf32>
      %14 = vector.broadcast %13 : vector<1x128xf32> to vector<8x128xf32>
      %15 = arith.addf %12, %14 : vector<8x128xf32>
      %16 = arith.negf %15 : vector<8x128xf32>
      %17 = math.exp %16 : vector<8x128xf32>
      %cst_14 = arith.constant 1.000000e+00 : f32
      %18 = vector.broadcast %cst_14 : f32 to vector<8x128xf32>
      %19 = arith.addf %18, %17 : vector<8x128xf32>
      %20 = arith.divf %18, %19 : vector<8x128xf32>
      %21 = vector.extract_strided_slice %20 {offsets = [0, 0], sizes = [8, 4], strides = [1, 1]} : vector<8x128xf32> to vector<8x4xf32>
      %c0_15 = arith.constant 0 : index
      %c0_16 = arith.constant 0 : index
      %22 = vector.load %arg5[%c0_15, %c0_16] : memref<8x4xf32, #tpu.memory_space<vmem>>, vector<8x4xf32>
      tpu.vector_store %arg5[%c0_15, %c0_16], %21 {strides = array<i32>} : memref<8x4xf32, #tpu.memory_space<vmem>>, vector<8x4xf32>,
    } else {
    }
    return
  }
  func.func @transform_0(%arg0: i32, %arg1: i32) -> (i32, i32) {
    %c0_i32 = arith.constant 0 : i32
    return %arg0, %arg1 : i32, i32
  }
  func.func @transform_1(%arg0: i32, %arg1: i32) -> (i32, i32) {
    %c0_i32 = arith.constant 0 : i32
    %c0_i32_0 = arith.constant 0 : i32
    return %arg1, %c0_i32 : i32, i32
  }
  func.func @transform_2(%arg0: i32, %arg1: i32) -> (i32, i32) {
    %c0_i32 = arith.constant 0 : i32
    %c0_i32_0 = arith.constant 0 : i32
    %c0_i32_1 = arith.constant 0 : i32
    return %c0_i32, %c0_i32_0 : i32, i32
  }
  func.func @transform_3(%arg0: i32, %arg1: i32) -> (i32, i32) {
    %c0_i32 = arith.constant 0 : i32
    %c0_i32_0 = arith.constant 0 : i32
    return %arg0, %c0_i32 : i32, i32
  }
}

</mosaic_0001>

<llo_original>
// kernel: ordinal_fully_connected.1
$region0: #{ordinal_fully_connected.1}
  #allocation0 [shape = 'u32[]', space=smem, size = 0x4, offset = 0x4, fixed_abs, tag = 'smem constant byte address 0x4 - core index']
  #allocation1 [shape = 'u32[144,128]{1,0:T(1,128)}', space=vmem, size = 0x12000, scoped, tag = 'internal scratch']
  #allocation2 [shape = 'f32[8,128]{1,0:T(8,128)}', space=vmem, size = 0x1000, scoped, tag = 'scratch operand']
  %s0 = inlined_call_operand.hbm [shape: f32[2,32], index: 0, kind: input, shape index: {}]
  %s1 = inlined_call_operand.hbm [shape: f32[32,128], index: 1, kind: input, shape index: {}]
  %s2 = inlined_call_operand.vmem [shape: f32[1,128], index: 2, kind: input, shape index: {}]
  %s3 = inlined_call_operand.hbm [shape: f32[2,4], index: 3, kind: output, shape index: {}]
  %s4 = sld [smem:[#allocation0]]
  $region38: #{ordinal_fully_connected.1} parent=0
    _
  %s6 = ssub.s32 1, %s4
  %s7 = scalar_select 0, %s6, %s4
  $region1: #{ordinal_fully_connected.1} parent=0
    #allocation3 [shape = 'u8[4096]{0}', space=vmem, size = 0x1000, scoped, tag = 'input window, operand 0, single buffered']
    #allocation4 [shape = 's32[1]{0}', space=sflag, size = 0x4, scoped, tag = 'scoped memory for ordinal_fully_connected.1']
    #allocation5 [shape = 's32[1]{0}', space=sflag, size = 0x4, scoped, tag = 'scoped memory for ordinal_fully_connected.1']
    #allocation6 [shape = 'u8[16384]{0}', space=vmem, size = 0x4000, scoped, tag = 'input window, operand 1, single buffered']
    #allocation7 [shape = 's32[1]{0}', space=sflag, size = 0x4, scoped, tag = 'scoped memory for ordinal_fully_connected.1']
    #allocation8 [shape = 'u8[4096]{0}', space=vmem, size = 0x1000, scoped, tag = 'output window, operand 0, single buffered']
    %8 = vsyncpa [#allocation4], 0
    %9 = vsyncpa [#allocation7], 0
    %10 = vsyncpa [#allocation5], 0
    // Predicated region
    $region2: #{ordinal_fully_connected.1} parent=1 // pred_check
      _
    $region3: #{ordinal_fully_connected.1} parent=1 // pred_check_branch
      %12 = sbr.rel (0) target = $region5
    $region4: #{ordinal_fully_connected.1} parent=1 // pred_region
      %s14 = ssub.s32 128, 32
      %15 = vsyncadd [#allocation4], %s14
      %s16 = sshll.u32 [#allocation3], 4
      %s17 = int_to_ptr.vmem [resolvable:$true] %s16
      %22 = dma.hbm_to_vmem [thread:$0]  %s0, 32, %s17, [#allocation4], 32, 32, 2
    $region5: #{ordinal_fully_connected.1} parent=1 // pred_fallthru
      _
    // Predicated region
    $region6: #{ordinal_fully_connected.1} parent=1 // pred_check
      _
    $region7: #{ordinal_fully_connected.1} parent=1 // pred_check_branch
      %24 = sbr.rel (0) target = $region9
    $region8: #{ordinal_fully_connected.1} parent=1 // pred_region
      %s26 = ssub.s32 512, 512
      %27 = vsyncadd [#allocation7], %s26
      %s28 = sshll.u32 [#allocation6], 4
      %s29 = int_to_ptr.vmem [resolvable:$true] %s28
      %34 = dma.hbm_to_vmem [thread:$0]  %s1, 512, %s29, [#allocation7], 128, 128, 8
    $region9: #{ordinal_fully_connected.1} parent=1 // pred_fallthru
      _
    // Predicated region
    $region10: #{ordinal_fully_connected.1} parent=1 // pred_check
      _
    $region11: #{ordinal_fully_connected.1} parent=1 // pred_check_branch
      %36 = sbr.rel (0) target = $region13
    $region12: #{ordinal_fully_connected.1} parent=1 // pred_region
      _
    $region13: #{ordinal_fully_connected.1} parent=1 // pred_fallthru
      _
    // Predicated region
    $region14: #{ordinal_fully_connected.1} parent=1 // pred_check
      _
    $region15: #{ordinal_fully_connected.1} parent=1 // pred_check_branch
      %38 = sbr.rel (0) target = $region17
    $region16: #{ordinal_fully_connected.1} parent=1 // pred_region
      %39 = dma.done [#allocation4], 128
    $region17: #{ordinal_fully_connected.1} parent=1 // pred_fallthru
      _
    // Predicated region
    $region18: #{ordinal_fully_connected.1} parent=1 // pred_check
      _
    $region19: #{ordinal_fully_connected.1} parent=1 // pred_check_branch
      %41 = sbr.rel (0) target = $region21
    $region20: #{ordinal_fully_connected.1} parent=1 // pred_region
      %42 = dma.done [#allocation7], 512
    $region21: #{ordinal_fully_connected.1} parent=1 // pred_fallthru
      _
    %p43 = scmp.eq.s32.totalorder 0, 0
    // Predicated region
    $region22: #{ordinal_fully_connected.1} parent=1 // pred_check
      %p44 = pneg %p43
    $region23: #{ordinal_fully_connected.1} parent=1 // pred_check_branch
      %46 = sbr.rel (%p44) target = $region25
    $region24: #{ordinal_fully_connected.1} parent=1 // pred_region
      %47 = vst [vmem:[#allocation2] sm:$0xff] 0.0
    $region25: #{ordinal_fully_connected.1} parent=1 // pred_fallthru
      _
    %v48 = vld [vmem:[#allocation2] sm:$0xff]
    %v49 = vld [vmem:[#allocation3] sm:$0xff]
    %v50 = vld [vmem:[#allocation6] sm:$0xff]
    %v51 = vld [vmem:[#allocation6 + $0x8] sm:$0xff]
    %v52 = vld [vmem:[#allocation6 + $0x10] sm:$0xff]
    %v53 = vld [vmem:[#allocation6 + $0x18] sm:$0xff]
    %vm54 = vcmask 261120
    %v56 = vsel %vm54, %v49, 0
    %58 = vmatprep.subr.mxu0 0.0
    %59 = vmatpush1.msra.mxu0 0.0
    %60 = vmatprep.subr.mxu0 0.0
    %61 = vmatpush1.msra.mxu0 0.0
    %62 = vmatprep.subr.mxu0 0.0
    %63 = vmatpush1.msra.mxu0 0.0
    %64 = vmatprep.subr.mxu0 0.0
    %65 = vmatpush1.msra.mxu0 0.0
    %66 = vmatprep.subr.mxu0 0.0
    %67 = vmatpush1.msra.mxu0 0.0
    %68 = vmatprep.subr.mxu0 0.0
    %69 = vmatpush1.msra.mxu0 0.0
    %70 = vmatprep.subr.mxu0 0.0
    %71 = vmatpush1.msra.mxu0 0.0
    %72 = vmatprep.subr.mxu0 0.0
    %73 = vmatpush1.msra.mxu0 0.0
    %74 = vmatprep.subr.mxu0 0.0
    %75 = vmatpush1.msra.mxu0 0.0
    %76 = vmatprep.subr.mxu0 0.0
    %77 = vmatpush1.msra.mxu0 0.0
    %78 = vmatprep.subr.mxu0 0.0
    %79 = vmatpush1.msra.mxu0 0.0
    %80 = vmatprep.subr.mxu0 0.0
    %81 = vmatpush1.msra.mxu0 0.0
    %82 = vmatprep.subr.mxu0 0.0
    %83 = vmatpush1.msra.mxu0 %v53
    %84 = vmatprep.subr.mxu0 0.0
    %85 = vmatpush1.msra.mxu0 %v52
    %86 = vmatprep.subr.mxu0 0.0
    %87 = vmatpush1.msra.mxu0 %v51
    %88 = vmatprep.subr.mxu0 0.0
    %89 = vmatpush1.msra.mxu0 %v50
    %90 = vmatprep.subr.mxu0 0.0
    %91 = vmatpush2.msra.mxu0 0.0
    %92 = vmatprep.subr.mxu0 0.0
    %93 = vmatpush2.msra.mxu0 0.0
    %94 = vmatprep.subr.mxu0 0.0
    %95 = vmatpush2.msra.mxu0 0.0
    %96 = vmatprep.subr.mxu0 0.0
    %97 = vmatpush2.msra.mxu0 0.0
    %98 = vmatprep.subr.mxu0 0.0
    %99 = vmatpush2.msra.mxu0 0.0
    %100 = vmatprep.subr.mxu0 0.0
    %101 = vmatpush2.msra.mxu0 0.0
    %102 = vmatprep.subr.mxu0 0.0
    %103 = vmatpush2.msra.mxu0 0.0
    %104 = vmatprep.subr.mxu0 0.0
    %105 = vmatpush2.msra.mxu0 0.0
    %106 = vmatprep.subr.mxu0 0.0
    %107 = vmatpush2.msra.mxu0 0.0
    %108 = vmatprep.subr.mxu0 0.0
    %109 = vmatpush2.msra.mxu0 0.0
    %110 = vmatprep.subr.mxu0 0.0
    %111 = vmatpush2.msra.mxu0 0.0
    %112 = vmatprep.subr.mxu0 0.0
    %113 = vmatpush2.msra.mxu0 0.0
    %114 = vmatprep.subr.mxu0 0.0
    %115 = vmatpush2.msra.mxu0 0.0
    %116 = vmatprep.subr.mxu0 0.0
    %117 = vmatpush2.msra.mxu0 0.0
    %118 = vmatprep.subr.mxu0 0.0
    %119 = vmatpush2.msra.mxu0 0.0
    %120 = vmatprep.subr.mxu0 0.0
    %121 = vmatpush2.msra.mxu0 0.0
    %122 = vmatprep.mubr.f32.mxu0 0.0
    %123 = vmatmul.mubr.f32.gmra.mxu0 %v56
    %v124 = vpop.f32.mrf.mxu0
    %v125 = vadd.f32 0.0, %v124
    %v126 = vpop.f32.mrf.mxu0
    %127 = vdwg.mxu0
    %v128 = vadd.f32 %v48, %v125
    %129 = vst [vmem:[#allocation2] sm:$0xff] %v128
    // Predicated region
    $region26: #{ordinal_fully_connected.1} parent=1 // pred_check
      %p130 = pneg %p43
    $region27: #{ordinal_fully_connected.1} parent=1 // pred_check_branch
      %132 = sbr.rel (%p130) target = $region29
    $region28: #{ordinal_fully_connected.1} parent=1 // pred_region
      %v133 = vld [vmem:[#allocation2] sm:$0xff]
      %v134 = vld [vmem:[%s2] sm:$0x1]
      %v136 = vlaneseq
      %v137 = vshrl.u32 %v136, 7
      %v138 = vsub.s32 0, %v137
      %v139 = vrot.slane %v134, %v138
      %v141 = vadd.f32 %v133, %v139
      %v142 = vxor.u32 %v141, 2147483648
      %v143 = vmul.f32 %v142, 1.442695
      %v144 = vpow.pop %v143
      %v145 = vadd.f32 %v144, 1.0
      %v146 = vrcp.pop %v145
      %v147 = vmul.f32 1.0, %v146
      %vm148 = vcmask 31744
      %149 = vst.msk [vmem:[#allocation8] sm:$0xff] %vm148, %v147
    $region29: #{ordinal_fully_connected.1} parent=1 // pred_fallthru
      _
    // Predicated region
    $region30: #{ordinal_fully_connected.1} parent=1 // pred_check
      _
    $region31: #{ordinal_fully_connected.1} parent=1 // pred_check_branch
      %151 = sbr.rel (0) target = $region33
    $region32: #{ordinal_fully_connected.1} parent=1 // pred_region
      %s153 = ssub.s32 128, 32
      %154 = vsyncadd [#allocation5], %s153
      %s155 = sshll.u32 [#allocation8], 4
      %s156 = int_to_ptr.vmem [resolvable:$true] %s155
      %161 = dma.vmem_to_hbm [thread:$0]  %s156, 32, %s3, [#allocation5], 32, 32, 2
    $region33: #{ordinal_fully_connected.1} parent=1 // pred_fallthru
      _
    // Predicated region
    $region34: #{ordinal_fully_connected.1} parent=1 // pred_check
      _
    $region35: #{ordinal_fully_connected.1} parent=1 // pred_check_branch
      %163 = sbr.rel (0) target = $region37
    $region36: #{ordinal_fully_connected.1} parent=1 // pred_region
      %164 = dma.done [#allocation5], 128
    $region37: #{ordinal_fully_connected.1} parent=1 // pred_fallthru
      _
    %165 = vsyncpa [#allocation4], 1
    %166 = vsyncpa [#allocation7], 1
    %167 = vsyncpa [#allocation5], 1

</llo_original>
